<compile_context>
chip_gen: v6e
topology: v6e:2x2x1
jax: 0.10.0
libtpu: 0.0.40
codegen_flags: <defaults>
</compile_context>

<pallas_src>
import jax
import jax.numpy as jnp
from jax.experimental import pallas as pl
from jax.experimental.pallas import tpu as pltpu


_LANES = 128
# Per-grid-step VMEM budget for one (input tile + lane-padded output tile)
# pair.  The pipeline double-buffers, so the resident working set is ~2x this.
_TARGET_STEP_BYTES = 16 * 1024 * 1024
# Below this total footprint use a single full-extent block (per-step overhead
# is already negligible; splitting would only add it back).
_MIN_SPLIT_BYTES = 4 * 1024 * 1024
# When splitting, make at least this many balanced tiles so v7x's two
# TensorCores each get similar work under dimension_semantics=("parallel",).
_MIN_SPLIT_TILES = 4
# Explicit scoped-VMEM ceiling: > 2 * _TARGET_STEP_BYTES working set, above
# v5e's 16 MiB default scoped limit, below v7x's 64 MiB physical VMEM.
_VMEM_LIMIT_BYTES = 48 * 1024 * 1024


def _density_packed_kernel(x_ref, w_ref, b_ref, o_ref):
    # x_ref: (tb, 128) lane-dense packed rows (pack = 128 // latent_dim
    #        original rows per packed row)
    # w_ref: (128, pack) block-diagonal weight
    # b_ref: (1,) f32 scalar in SMEM
    # o_ref: (tb, pack)
    acc = jnp.dot(x_ref[...], w_ref[...], preferred_element_type=jnp.float32)
    o_ref[...] = (acc + b_ref[0]).astype(o_ref.dtype)
    # TODO(synk): if a v7x bundle dump shows the store slot / tiny-N MXU result
    # path as binding, relayout acc to a (tb*pack//128, 128) lane-dense output
    # block (removes masked vst.msk stores) and/or swap the N=pack MXU dot for
    # a VPU broadcast-multiply + segmented XLU reduce; kept as-is here for
    # lowering robustness.


def _density_rowsum_kernel(x_ref, w_ref, b_ref, o_ref):
    # Fallback for latent_dim that does not pack evenly into 128 lanes.
    # x_ref: (tb, D); w_ref: (1, D); b_ref: (1,) f32 in SMEM; o_ref: (tb, 1)
    prod = x_ref[...] * w_ref[...]                 # native-dtype VPU multiply
    acc = jnp.sum(prod, axis=-1, keepdims=True, dtype=jnp.float32)
    o_ref[...] = (acc + b_ref[0]).astype(o_ref.dtype)


def _sublane_multiple(dtype):
    # Minimum sublane tile per dtype: 8 rows for 4-byte, 16 for 2-byte,
    # 32 for 1-byte dtypes.
    return max(8, 32 // jnp.dtype(dtype).itemsize)


def _pick_tile_rows(total_rows, bytes_per_row, row_multiple):
    """Balanced row tile, multiple of `row_multiple`, ~_TARGET_STEP_BYTES/step."""
    total_bytes = total_rows * bytes_per_row
    if total_bytes <= _MIN_SPLIT_BYTES or total_rows <= row_multiple:
        return total_rows                          # single full-extent block
    max_tb = max(row_multiple,
                 (_TARGET_STEP_BYTES // max(bytes_per_row, 1))
                 // row_multiple * row_multiple)
    # Balanced tiling (avoids one huge tile + ragged tail starving one v7x TC).
    n_tiles = max(pl.cdiv(total_rows, max_tb), _MIN_SPLIT_TILES)
    tb = pl.cdiv(pl.cdiv(total_rows, n_tiles), row_multiple) * row_multiple
    return max(row_multiple, min(tb, total_rows))


def density_function(x, weight, bias):
    """nn.Linear(latent_dim, 1): y = x @ weight.T + bias.

    x:      (..., latent_dim)
    weight: (1, latent_dim)   (PyTorch layout)
    bias:   (1,)
    returns (..., 1)
    """
    latent_dim = x.shape[-1]
    lead_shape = x.shape[:-1]
    x2 = x.reshape(-1, latent_dim)
    batch = x2.shape[0]
    dtype = x2.dtype
    itemsize = jnp.dtype(dtype).itemsize

    w_row = weight.reshape(latent_dim).astype(dtype)    # (D,)
    b = bias.reshape(1).astype(jnp.float32)             # (1,) -> SMEM scalar

    if batch == 0:
        return jnp.zeros((*lead_shape, 1), dtype=dtype)

    def cost(nrows):
        return pl.CostEstimate(
            flops=2 * nrows * latent_dim,
            transcendentals=0,
            bytes_accessed=(nrows * latent_dim * itemsize
                            + nrows * itemsize
                            + latent_dim * itemsize))

    params = pltpu.CompilerParams(
        dimension_semantics=("parallel",),
        vmem_limit_bytes=_VMEM_LIMIT_BYTES,
    )
    sub_mult = _sublane_multiple(dtype)

    pack = _LANES // latent_dim if latent_dim < _LANES else 1
    use_packed = (latent_dim < _LANES and _LANES % latent_dim == 0
                  and pack > 1 and batch >= pack)

    if use_packed:
        # Fast path: pack `pack` rows into one 128-lane row (free, contiguous
        # reshape) and reduce with a tiny block-diagonal MXU matmul.
        n_main = (batch // pack) * pack
        rows = n_main // pack
        packed_dim = pack * latent_dim                    # == 128
        x_packed = x2[:n_main].reshape(rows, packed_dim)
        # Block-diagonal weight: wblk[k*D + j, k] = w[j]
        eye = jnp.eye(pack, dtype=dtype)
        wblk = (eye[:, None, :] * w_row[None, :, None]).reshape(packed_dim, pack)

        # Honest per-step budget: 128-lane input row + lane-PADDED output row
        # (the (tb, pack) block is padded to 128 lanes in VMEM).
        bytes_per_row = 2 * _LANES * itemsize
        tb = _pick_tile_rows(rows, bytes_per_row, sub_mult)
        grid = (pl.cdiv(rows, tb),)

        out_main = pl.pallas_call(
            _density_packed_kernel,
            out_shape=jax.ShapeDtypeStruct((rows, pack), dtype),
            grid_spec=pltpu.PrefetchScalarGridSpec(
                num_scalar_prefetch=0,
                grid=grid,
                in_specs=[
                    pl.BlockSpec((tb, packed_dim), lambda i: (i, 0)),
                    pl.BlockSpec((packed_dim, pack), lambda i: (0, 0)),
                    pl.BlockSpec(memory_space=pltpu.MemorySpace.SMEM),
                ],
                out_specs=pl.BlockSpec((tb, pack), lambda i: (i, 0)),
            ),
            compiler_params=params,
            cost_estimate=cost(n_main),
        )(x_packed, wblk, b).reshape(n_main, 1)

        if n_main == batch:
            out = out_main
        else:
            # < pack leftover rows: plain JAX, so a single stray row never
            # forces the whole batch onto the lane-padded fallback path.
            x_rem = x2[n_main:].astype(jnp.float32)
            out_rem = (x_rem @ w_row.astype(jnp.float32)[:, None]
                       + b).astype(dtype)
            out = jnp.concatenate([out_main, out_rem], axis=0)
    else:
        # General path: VPU multiply + f32 lane reduce.
        w2 = w_row.reshape(1, latent_dim)
        # Lane-PADDED sizing: (tb, D) pads D -> ceil(D/128)*128 lanes in VMEM
        # and the (tb, 1) output pads to 128 lanes as well.
        padded_d = pl.cdiv(latent_dim, _LANES) * _LANES
        bytes_per_row = (padded_d + _LANES) * itemsize
        tb = _pick_tile_rows(batch, bytes_per_row, sub_mult)
        grid = (pl.cdiv(batch, tb),)

        out = pl.pallas_call(
            _density_rowsum_kernel,
            out_shape=jax.ShapeDtypeStruct((batch, 1), dtype),
            grid_spec=pltpu.PrefetchScalarGridSpec(
                num_scalar_prefetch=0,
                grid=grid,
                in_specs=[
                    pl.BlockSpec((tb, latent_dim), lambda i: (i, 0)),
                    pl.BlockSpec((1, latent_dim), lambda i: (0, 0)),
                    pl.BlockSpec(memory_space=pltpu.MemorySpace.SMEM),
                ],
                out_specs=pl.BlockSpec((tb, 1), lambda i: (i, 0)),
            ),
            compiler_params=params,
            cost_estimate=cost(batch),
        )(x2, w2, b)

    return out.reshape(*lead_shape, 1)


if __name__ == "__main__":
    key = jax.random.PRNGKey(0)
    kx, kw, kb, kx_big, kx_odd, kw_odd, kb_odd = jax.random.split(key, 7)

    density_fn = jax.jit(density_function)

    # --- small check (packed fast path, single full-extent block) ---
    latent_dim = 32
    batch = 8
    bound = 1.0 / (latent_dim ** 0.5)   # mimic nn.Linear's uniform init range
    weight = jax.random.uniform(kw, (1, latent_dim), jnp.float32, -bound, bound)
    bias = jax.random.uniform(kb, (1,), jnp.float32, -bound, bound)
    x = jax.random.normal(kx, (batch, latent_dim), jnp.float32)

    out = jax.block_until_ready(density_fn(x, weight, bias))
    ref = x @ weight.T + bias
    assert out.shape == (batch, 1), out.shape
    assert jnp.allclose(out, ref, atol=1e-5, rtol=1e-5)

    # --- larger batch: balanced grid > 1, ragged tail, plus 1 leftover row ---
    big_batch = 70001
    xb = jax.random.normal(kx_big, (big_batch, latent_dim), jnp.float32)
    out_b = jax.block_until_ready(density_fn(xb, weight, bias))
    ref_b = xb @ weight.T + bias
    assert out_b.shape == (big_batch, 1), out_b.shape
    assert jnp.allclose(out_b, ref_b, atol=1e-4, rtol=1e-4)

    # --- non-dividing latent_dim: rowsum fallback path (padding-aware sizing) ---
    odd_dim = 24
    odd_batch = 16
    bound_o = 1.0 / (odd_dim ** 0.5)
    w_odd = jax.random.uniform(kw_odd, (1, odd_dim), jnp.float32, -bound_o, bound_o)
    b_odd = jax.random.uniform(kb_odd, (1,), jnp.float32, -bound_o, bound_o)
    x_odd = jax.random.normal(kx_odd, (odd_batch, odd_dim), jnp.float32)
    out_o = jax.block_until_ready(density_fn(x_odd, w_odd, b_odd))
    ref_o = x_odd @ w_odd.T + b_odd
    assert out_o.shape == (odd_batch, 1), out_o.shape
    assert jnp.allclose(out_o, ref_o, atol=1e-5, rtol=1e-5)

    print("KERNEL_OK")
</pallas_src>

<mosaic_0001>
module attributes {stable_mosaic.version = 11 : i64} {
  func.func @_density_packed_kernel(%arg0: i32, %arg1: memref<2x128xf32, #tpu.memory_space<vmem>>, %arg2: memref<128x4xf32, #tpu.memory_space<vmem>>, %arg3: memref<1xf32, #tpu.memory_space<smem>>, %arg4: memref<2x4xf32, #tpu.memory_space<vmem>>) attributes {dimension_semantics = [#tpu.dimension_semantics<parallel>], iteration_bounds = array<i64: 1>, scalar_prefetch = 0 : i64, scratch_operands = 0 : i64, tpu.core_type = #tpu.core_type<tc>, window_params = [{transform_indices = @transform_0, window_bounds = array<i64: 2, 128>}, {pipeline_mode = #tpu.pipeline_mode<synchronous>, transform_indices = @transform_1, window_bounds = array<i64: 128, 4>}, {transform_indices = @transform_2, window_bounds = array<i64: 1>}, {transform_indices = @transform_3, window_bounds = array<i64: 2, 4>}]} {
    %c0 = arith.constant 0 : index
    %c0_0 = arith.constant 0 : index
    %0 = vector.load %arg1[%c0, %c0_0] : memref<2x128xf32, #tpu.memory_space<vmem>>, vector<2x128xf32>
    %c0_1 = arith.constant 0 : index
    %c0_2 = arith.constant 0 : index
    %1 = vector.load %arg2[%c0_1, %c0_2] : memref<128x4xf32, #tpu.memory_space<vmem>>, vector<128x4xf32>
    %cst = arith.constant dense<0.000000e+00> : vector<2x4xf32>
    %2 = tpu.matmul %0, %1, %cst {dimension_numbers = #tpu.dot_dimension_numbers<[1], [0], [0], [1], [0, 0, 1, 1], [], []>} : vector<2x128xf32>, vector<128x4xf32>, vector<2x4xf32> -> vector<2x4xf32>
    %c0_3 = arith.constant 0 : index
    %3 = memref.load %arg3[%c0_3] : memref<1xf32, #tpu.memory_space<smem>>
    %4 = vector.broadcast %3 : f32 to vector<2x4xf32>
    %5 = arith.addf %2, %4 : vector<2x4xf32>
    %c0_4 = arith.constant 0 : index
    %c0_5 = arith.constant 0 : index
    %6 = vector.load %arg4[%c0_4, %c0_5] : memref<2x4xf32, #tpu.memory_space<vmem>>, vector<2x4xf32>
    tpu.vector_store %arg4[%c0_4, %c0_5], %5 {strides = array<i32>} : memref<2x4xf32, #tpu.memory_space<vmem>>, vector<2x4xf32>,
    return
  }
  func.func @transform_0(%arg0: i32) -> (i32, i32) {
    %c0_i32 = arith.constant 0 : i32
    %c0_i32_0 = arith.constant 0 : i32
    return %arg0, %c0_i32 : i32, i32
  }
  func.func @transform_1(%arg0: i32) -> (i32, i32) {
    %c0_i32 = arith.constant 0 : i32
    %c0_i32_0 = arith.constant 0 : i32
    %c0_i32_1 = arith.constant 0 : i32
    return %c0_i32, %c0_i32_0 : i32, i32
  }
  func.func @transform_2(%arg0: i32) -> i32 {
    %c0_i32 = arith.constant 0 : i32
    %c0_i32_0 = arith.constant 0 : i32
    return %c0_i32 : i32
  }
  func.func @transform_3(%arg0: i32) -> (i32, i32) {
    %c0_i32 = arith.constant 0 : i32
    %c0_i32_0 = arith.constant 0 : i32
    return %arg0, %c0_i32 : i32, i32
  }
}

</mosaic_0001>

<llo_original>
// kernel: density_function.1
$region0: #{density_function.1}
  #allocation0 [shape = 'u32[]', space=smem, size = 0x4, offset = 0x4, fixed_abs, tag = 'smem constant byte address 0x4 - core index']
  #allocation1 [shape = 'u32[144,128]{1,0:T(1,128)}', space=vmem, size = 0x12000, scoped, tag = 'internal scratch']
  #allocation2 [shape = 'f32[1]{0:T(128)S(6)}', space=smem, size = 0x200, scoped, tag = 'scoped memory for density_function.1']
  %s0 = inlined_call_operand.vmem [shape: f32[2,128], index: 0, kind: input, shape index: {}]
  %s1 = inlined_call_operand.vmem [shape: f32[128,4], index: 1, kind: input, shape index: {}]
  %s2 = inlined_call_operand.<no memory space> [shape: f32[1], index: 2, kind: input, shape index: {}]
  %s3 = inlined_call_operand.vmem [shape: f32[2,4], index: 3, kind: output, shape index: {}]
  %s4 = sld [smem:[#allocation0]]
  $region22: #{density_function.1} parent=0
    _
  %s6 = ssub.s32 1, %s4
  %s7 = scalar_select 0, %s6, %s4
  %8 = sst [smem:[#allocation2]] %s2
  // Predicated region
  $region2: #{density_function.1} parent=0 // pred_check
    _
  $region3: #{density_function.1} parent=0 // pred_check_branch
    %10 = sbr.rel (0) target = $region5
  $region4: #{density_function.1} parent=0 // pred_region
    _
  $region5: #{density_function.1} parent=0 // pred_fallthru
    _
  // Predicated region
  $region6: #{density_function.1} parent=0 // pred_check
    _
  $region7: #{density_function.1} parent=0 // pred_check_branch
    %12 = sbr.rel (0) target = $region9
  $region8: #{density_function.1} parent=0 // pred_region
    _
  $region9: #{density_function.1} parent=0 // pred_fallthru
    _
  // Predicated region
  $region10: #{density_function.1} parent=0 // pred_check
    _
  $region11: #{density_function.1} parent=0 // pred_check_branch
    %14 = sbr.rel (0) target = $region13
  $region12: #{density_function.1} parent=0 // pred_region
    _
  $region13: #{density_function.1} parent=0 // pred_fallthru
    _
  %v15 = vld [vmem:[%s0] sm:$0x3]
  %v16 = vld [vmem:[%s1] sm:$0xff]
  %v17 = vld [vmem:[%s1 + $0x8] sm:$0xff]
  %v18 = vld [vmem:[%s1 + $0x10] sm:$0xff]
  %v19 = vld [vmem:[%s1 + $0x18] sm:$0xff]
  %v20 = vld [vmem:[%s1 + $0x20] sm:$0xff]
  %v21 = vld [vmem:[%s1 + $0x28] sm:$0xff]
  %v22 = vld [vmem:[%s1 + $0x30] sm:$0xff]
  %v23 = vld [vmem:[%s1 + $0x38] sm:$0xff]
  %v24 = vld [vmem:[%s1 + $0x40] sm:$0xff]
  %v25 = vld [vmem:[%s1 + $0x48] sm:$0xff]
  %v26 = vld [vmem:[%s1 + $0x50] sm:$0xff]
  %v27 = vld [vmem:[%s1 + $0x58] sm:$0xff]
  %v28 = vld [vmem:[%s1 + $0x60] sm:$0xff]
  %v29 = vld [vmem:[%s1 + $0x68] sm:$0xff]
  %v30 = vld [vmem:[%s1 + $0x70] sm:$0xff]
  %v31 = vld [vmem:[%s1 + $0x78] sm:$0xff]
  %s32 = sld [smem:[#allocation2]]
  %v33 = vstv %s32
  %34 = vmatprep.subr.mxu0 0.0
  %35 = vmatpush1.msra.mxu0 %v31
  %36 = vmatprep.subr.mxu0 0.0
  %37 = vmatpush1.msra.mxu0 %v30
  %38 = vmatprep.subr.mxu0 0.0
  %39 = vmatpush1.msra.mxu0 %v29
  %40 = vmatprep.subr.mxu0 0.0
  %41 = vmatpush1.msra.mxu0 %v28
  %42 = vmatprep.subr.mxu0 0.0
  %43 = vmatpush1.msra.mxu0 %v27
  %44 = vmatprep.subr.mxu0 0.0
  %45 = vmatpush1.msra.mxu0 %v26
  %46 = vmatprep.subr.mxu0 0.0
  %47 = vmatpush1.msra.mxu0 %v25
  %48 = vmatprep.subr.mxu0 0.0
  %49 = vmatpush1.msra.mxu0 %v24
  %50 = vmatprep.subr.mxu0 0.0
  %51 = vmatpush1.msra.mxu0 %v23
  %52 = vmatprep.subr.mxu0 0.0
  %53 = vmatpush1.msra.mxu0 %v22
  %54 = vmatprep.subr.mxu0 0.0
  %55 = vmatpush1.msra.mxu0 %v21
  %56 = vmatprep.subr.mxu0 0.0
  %57 = vmatpush1.msra.mxu0 %v20
  %58 = vmatprep.subr.mxu0 0.0
  %59 = vmatpush1.msra.mxu0 %v19
  %60 = vmatprep.subr.mxu0 0.0
  %61 = vmatpush1.msra.mxu0 %v18
  %62 = vmatprep.subr.mxu0 0.0
  %63 = vmatpush1.msra.mxu0 %v17
  %64 = vmatprep.subr.mxu0 0.0
  %65 = vmatpush1.msra.mxu0 %v16
  %66 = vmatprep.subr.mxu0 0.0
  %67 = vmatpush2.msra.mxu0 0.0
  %68 = vmatprep.subr.mxu0 0.0
  %69 = vmatpush2.msra.mxu0 0.0
  %70 = vmatprep.subr.mxu0 0.0
  %71 = vmatpush2.msra.mxu0 0.0
  %72 = vmatprep.subr.mxu0 0.0
  %73 = vmatpush2.msra.mxu0 0.0
  %74 = vmatprep.subr.mxu0 0.0
  %75 = vmatpush2.msra.mxu0 0.0
  %76 = vmatprep.subr.mxu0 0.0
  %77 = vmatpush2.msra.mxu0 0.0
  %78 = vmatprep.subr.mxu0 0.0
  %79 = vmatpush2.msra.mxu0 0.0
  %80 = vmatprep.subr.mxu0 0.0
  %81 = vmatpush2.msra.mxu0 0.0
  %82 = vmatprep.subr.mxu0 0.0
  %83 = vmatpush2.msra.mxu0 0.0
  %84 = vmatprep.subr.mxu0 0.0
  %85 = vmatpush2.msra.mxu0 0.0
  %86 = vmatprep.subr.mxu0 0.0
  %87 = vmatpush2.msra.mxu0 0.0
  %88 = vmatprep.subr.mxu0 0.0
  %89 = vmatpush2.msra.mxu0 0.0
  %90 = vmatprep.subr.mxu0 0.0
  %91 = vmatpush2.msra.mxu0 0.0
  %92 = vmatprep.subr.mxu0 0.0
  %93 = vmatpush2.msra.mxu0 0.0
  %94 = vmatprep.subr.mxu0 0.0
  %95 = vmatpush2.msra.mxu0 0.0
  %96 = vmatprep.subr.mxu0 0.0
  %97 = vmatpush2.msra.mxu0 0.0
  %98 = vmatprep.mubr.f32.mxu0 0.0
  %99 = vmatmul.mubr.f32.gmra.mxu0 %v15
  %v100 = vpop.f32.mrf.mxu0
  %v101 = vadd.f32 %v33, %v100
  %v102 = vpop.f32.mrf.mxu0
  %103 = vdwg.mxu0
  %vm104 = vcmask 25600
  %105 = vst.msk [vmem:[%s3] sm:$0x3] %vm104, %v101
  // Predicated region
  $region14: #{density_function.1} parent=0 // pred_check
    _
  $region15: #{density_function.1} parent=0 // pred_check_branch
    %107 = sbr.rel (0) target = $region17
  $region16: #{density_function.1} parent=0 // pred_region
    _
  $region17: #{density_function.1} parent=0 // pred_fallthru
    _
  // Predicated region
  $region18: #{density_function.1} parent=0 // pred_check
    _
  $region19: #{density_function.1} parent=0 // pred_check_branch
    %109 = sbr.rel (0) target = $region21
  $region20: #{density_function.1} parent=0 // pred_region
    _
  $region21: #{density_function.1} parent=0 // pred_fallthru
    _

</llo_original>
